<compile_context>
chip_gen: v7x
topology: tpu7x:2x2x1
jax: 0.10.0
libtpu: 0.0.40
codegen_flags: <defaults>
</compile_context>

<pallas_src>
import jax
import jax.numpy as jnp
from jax.experimental import pallas as pl
from jax.experimental.pallas import tpu as pltpu


def _simple_fusion_kernel(x_ref, w_ref, b_ref, o_ref):
    # Input sanitization: NaN / +-Inf -> 0.0 (scalar select, pure VPU filler).
    x = x_ref[...]
    x = jnp.where(jnp.isfinite(x), x, 0.0)

    # Linear projection on the MXU, f32 accumulation, default precision.
    y = jnp.dot(x, w_ref[...], preferred_element_type=jnp.float32)
    y = y + b_ref[...]  # (1, N) bias row, one broadcasted VPU add

    # Output sanitization.
    y = jnp.where(jnp.isfinite(y), y, 0.0)
    o_ref[...] = y.astype(o_ref.dtype)


def _round_up(a: int, b: int) -> int:
    return (a + b - 1) // b * b


def _cdiv(a: int, b: int) -> int:
    return -(-a // b)


def _num_tensorcores() -> int:
    """Best-effort TensorCores-per-chip (v7x=2, v5e/v6e=1). Safe fallback 1."""
    try:
        info = pltpu.get_tpu_info()
        for name in ("num_cores", "core_count", "num_tensorcores",
                     "tensorcore_count", "cores_per_chip"):
            v = getattr(info, name, None)
            if isinstance(v, int) and v > 0:
                return v
    except Exception:
        pass
    try:
        v = getattr(jax.devices()[0], "num_cores", None)
        if isinstance(v, int) and v > 0:
            return v
    except Exception:
        pass
    return 1


def _physical_vmem_bytes() -> int:
    try:
        v = getattr(pltpu.get_tpu_info(), "vmem_capacity_bytes", None)
        if isinstance(v, int) and v > 0:
            return v
    except Exception:
        pass
    return 64 << 20  # v7x lower bound; safe clamp on every generation


def prepare_fusion_params(weight, bias):
    """One-time (per-weight) preprocessing hoisted off the hot path.

    Builds the lane-dense block-diagonal weight kron(I_pack, W) and the tiled
    bias row so that an N<128 output becomes full-128-lane stores in-kernel.
    The extra weight entries are exact zeros, so the result is bit-identical.
    """
    K, N = weight.shape
    pack = 128 // N if (N < 128 and 128 % N == 0) else 1
    if pack > 1:
        w_in = jnp.kron(jnp.eye(pack, dtype=weight.dtype), weight)  # (pack*K, 128)
        b_in = jnp.tile(bias, pack).reshape(1, pack * N)
    else:
        w_in = weight
        b_in = bias.reshape(1, N)
    return {"w_in": w_in, "b_in": b_in, "pack": pack, "K": K, "N": N}


def simple_fusion(x, weight=None, bias=None, *, params=None, tile_m: int = 8192):
    """SimpleFusion forward.

    x:      [..., K]  with K = base_hidden * n_layers
    weight: [K, N]    (transposed vs. PyTorch's [N, K] storage)
    bias:   [N]
    params: optional output of prepare_fusion_params (avoids per-call packing)
    """
    if params is None:
        params = prepare_fusion_params(weight, bias)
    w_in, b_in = params["w_in"], params["b_in"]
    pack, K, N = params["pack"], params["K"], params["N"]

    orig_shape = x.shape
    assert orig_shape[-1] == K, "last dim of x must be base_hidden * n_layers"
    x2d = x.reshape(-1, K)
    M = x2d.shape[0]
    if M == 0:  # empty token batch: nothing to launch
        return jnp.zeros((*orig_shape[:-1], N), dtype=x.dtype)

    # Pad ONLY to a multiple of `pack` (<= pack-1 rows) when the lane-dense
    # row folding strictly requires it; never pad to the grid/tile size.
    M_pack = _round_up(M, pack)
    if M_pack != M:
        x2d = jnp.pad(x2d, ((0, M_pack - M), (0, 0)))
    rows = M_pack // pack
    kp = pack * K
    np_ = pack * N
    x_in = x2d.reshape(rows, kp)  # free row-major relabel

    # --- M tiling ------------------------------------------------------------
    ncores = _num_tensorcores()
    desired = _round_up(max(tile_m // pack, 8), 8)
    if ncores > 1:
        # Multi-core (v7x): aim for >= 2 grid steps per TensorCore so each core
        # keeps DMA/compute overlap and odd grids don't load-imbalance.
        desired = min(desired, max(_round_up(_cdiv(rows, 2 * ncores), 8), 8))
    tile_rows = min(desired, _round_up(rows, 8))
    if tile_rows > rows and rows < 8:
        tile_rows = rows  # tiny input: single full-extent block (legal shape)
    grid_m = _cdiv(rows, tile_rows)

    # --- VMEM budget from the actual per-step footprint -----------------------
    xb = jnp.dtype(x.dtype).itemsize
    wb = jnp.dtype(w_in.dtype).itemsize
    footprint = (2 * tile_rows * kp * xb       # x tile, double buffered
                 + 2 * tile_rows * np_ * xb    # out tile, double buffered
                 + 2 * kp * np_ * wb           # weight (constant block, 2 bufs)
                 + 2 * np_ * wb                # bias
                 + tile_rows * (kp + np_) * 4)  # f32 intermediates
    vmem_limit = int(min(max(footprint + footprint // 2 + (8 << 20), 32 << 20),
                         _physical_vmem_bytes()))

    out = pl.pallas_call(
        _simple_fusion_kernel,
        out_shape=jax.ShapeDtypeStruct((rows, np_), x.dtype),
        grid_spec=pl.GridSpec(
            grid=(grid_m,),
            in_specs=[
                pl.BlockSpec((tile_rows, kp), lambda i: (i, 0)),  # x tile
                pl.BlockSpec((kp, np_), lambda i: (0, 0)),        # block-diag weight
                pl.BlockSpec((1, np_), lambda i: (0, 0)),         # bias row
            ],
            out_specs=pl.BlockSpec((tile_rows, np_), lambda i: (i, 0)),
        ),
        compiler_params=pltpu.CompilerParams(
            dimension_semantics=("parallel",),
            vmem_limit_bytes=vmem_limit,
        ),
    )(x_in, w_in, b_in)

    out = out.reshape(M_pack, N)[:M]
    return out.reshape(*orig_shape[:-1], N)


if __name__ == "__main__":
    # Small shapes consistent with the module: base_hidden=32, n_layers=3.
    base_hidden = 32
    n_layers = 3
    K = base_hidden * n_layers  # 96
    N = base_hidden             # 32

    key = jax.random.PRNGKey(0)
    kx, kw, kb = jax.random.split(key, 3)

    # PyTorch-style uniform init with bound 1/sqrt(fan_in); weight stored as W^T.
    bound = 1.0 / (K ** 0.5)
    weight = jax.random.uniform(kw, (K, N), jnp.float32, -bound, bound)
    bias = jax.random.uniform(kb, (N,), jnp.float32, -bound, bound)

    # Hoist the one-time weight packing off the per-call hot path.
    params = prepare_fusion_params(weight, bias)

    def reference(x):
        xc = jnp.where(jnp.isfinite(x), x, 0.0)
        y = xc @ weight + bias
        return jnp.where(jnp.isfinite(y), y, 0.0)

    # Case 1: [B, S, K] with injected NaN/Inf (exercises the sanitize path).
    B, S = 2, 8
    x = jax.random.normal(kx, (B, S, K), dtype=jnp.float32)
    x = x.at[0, 0, 0].set(jnp.nan)
    x = x.at[1, 3, 5].set(jnp.inf)
    x = x.at[1, 7, 10].set(-jnp.inf)

    out = jax.block_until_ready(simple_fusion(x, params=params))
    ref = reference(x)
    assert out.shape == (B, S, N)
    assert jnp.allclose(out, ref, atol=1e-5, rtol=1e-5)
    assert not bool(jnp.isnan(out).any()) and not bool(jnp.isinf(out).any())

    # Case 2: ragged token count (M = 21, not a multiple of pack or tile) to
    # exercise the minimal-pad + ragged-last-block path.
    x2 = jax.random.normal(jax.random.PRNGKey(1), (3, 7, K), dtype=jnp.float32)
    out2 = jax.block_until_ready(simple_fusion(x2, weight, bias, tile_m=64))
    assert out2.shape == (3, 7, N)
    assert jnp.allclose(out2, reference(x2), atol=1e-5, rtol=1e-5)

    print("KERNEL_OK")
</pallas_src>

<mosaic_0001>
module attributes {stable_mosaic.version = 11 : i64} {
  func.func @_simple_fusion_kernel(%arg0: i32, %arg1: memref<4x384xf32, #tpu.memory_space<vmem>>, %arg2: memref<384x128xf32, #tpu.memory_space<vmem>>, %arg3: memref<1x128xf32, #tpu.memory_space<vmem>>, %arg4: memref<4x128xf32, #tpu.memory_space<vmem>>) attributes {dimension_semantics = [#tpu.dimension_semantics<parallel>], iteration_bounds = array<i64: 1>, scalar_prefetch = 0 : i64, scratch_operands = 0 : i64, tpu.core_type = #tpu.core_type<tc>, window_params = [{transform_indices = @transform_0, window_bounds = array<i64: 4, 384>}, {pipeline_mode = #tpu.pipeline_mode<synchronous>, transform_indices = @transform_1, window_bounds = array<i64: 384, 128>}, {pipeline_mode = #tpu.pipeline_mode<synchronous>, transform_indices = @transform_2, window_bounds = array<i64: 1, 128>}, {transform_indices = @transform_3, window_bounds = array<i64: 4, 128>}]} {
    %c0 = arith.constant 0 : index
    %c0_0 = arith.constant 0 : index
    %0 = vector.load %arg1[%c0, %c0_0] : memref<4x384xf32, #tpu.memory_space<vmem>>, vector<4x384xf32>
    %1 = tpu.weird %0 : vector<4x384xf32> -> vector<4x384xi1>
    %cst = arith.constant dense<true> : vector<4x384xi1>
    %2 = arith.xori %1, %cst : vector<4x384xi1>
    %cst_1 = arith.constant 0.000000e+00 : f32
    %3 = vector.broadcast %cst_1 : f32 to vector<4x384xf32>
    %4 = arith.select %2, %0, %3 : vector<4x384xi1>, vector<4x384xf32>
    %c0_2 = arith.constant 0 : index
    %c0_3 = arith.constant 0 : index
    %5 = vector.load %arg2[%c0_2, %c0_3] : memref<384x128xf32, #tpu.memory_space<vmem>>, vector<384x128xf32>
    %cst_4 = arith.constant dense<0.000000e+00> : vector<4x128xf32>
    %6 = tpu.matmul %4, %5, %cst_4 {dimension_numbers = #tpu.dot_dimension_numbers<[1], [0], [0], [1], [0, 0, 1, 1], [], []>} : vector<4x384xf32>, vector<384x128xf32>, vector<4x128xf32> -> vector<4x128xf32>
    %c0_5 = arith.constant 0 : index
    %c0_6 = arith.constant 0 : index
    %7 = vector.load %arg3[%c0_5, %c0_6] : memref<1x128xf32, #tpu.memory_space<vmem>>, vector<1x128xf32>
    %8 = vector.broadcast %7 : vector<1x128xf32> to vector<4x128xf32>
    %9 = arith.addf %6, %8 : vector<4x128xf32>
    %10 = tpu.weird %9 : vector<4x128xf32> -> vector<4x128xi1>
    %cst_7 = arith.constant dense<true> : vector<4x128xi1>
    %11 = arith.xori %10, %cst_7 : vector<4x128xi1>
    %cst_8 = arith.constant 0.000000e+00 : f32
    %12 = vector.broadcast %cst_8 : f32 to vector<4x128xf32>
    %13 = arith.select %11, %9, %12 : vector<4x128xi1>, vector<4x128xf32>
    %c0_9 = arith.constant 0 : index
    %c0_10 = arith.constant 0 : index
    %14 = vector.load %arg4[%c0_9, %c0_10] : memref<4x128xf32, #tpu.memory_space<vmem>>, vector<4x128xf32>
    tpu.vector_store %arg4[%c0_9, %c0_10], %13 {strides = array<i32>} : memref<4x128xf32, #tpu.memory_space<vmem>>, vector<4x128xf32>,
    return
  }
  func.func @transform_0(%arg0: i32) -> (i32, i32) {
    %c0_i32 = arith.constant 0 : i32
    %c0_i32_0 = arith.constant 0 : i32
    return %arg0, %c0_i32 : i32, i32
  }
  func.func @transform_1(%arg0: i32) -> (i32, i32) {
    %c0_i32 = arith.constant 0 : i32
    %c0_i32_0 = arith.constant 0 : i32
    %c0_i32_1 = arith.constant 0 : i32
    return %c0_i32, %c0_i32_0 : i32, i32
  }
  func.func @transform_2(%arg0: i32) -> (i32, i32) {
    %c0_i32 = arith.constant 0 : i32
    %c0_i32_0 = arith.constant 0 : i32
    %c0_i32_1 = arith.constant 0 : i32
    return %c0_i32, %c0_i32_0 : i32, i32
  }
  func.func @transform_3(%arg0: i32) -> (i32, i32) {
    %c0_i32 = arith.constant 0 : i32
    %c0_i32_0 = arith.constant 0 : i32
    return %arg0, %c0_i32 : i32, i32
  }
}

</mosaic_0001>

<llo_original>
// kernel: tpu_custom_call.1
$region0: #{tpu_custom_call.1}
  #allocation0 [shape = 'u32[]', space=smem, size = 0x4, offset = 0x4, fixed_abs, tag = 'smem constant byte address 0x4 - core index']
  #allocation1 [shape = 'u32[144,128]{1,0:T(1,128)}', space=vmem, size = 0x12000, scoped, tag = 'internal scratch']
  %s0 = inlined_call_operand.hbm [shape: f32[4,384], index: 0, kind: input, shape index: {}]
  %s1 = inlined_call_operand.hbm [shape: f32[384,128], index: 1, kind: input, shape index: {}]
  %s2 = inlined_call_operand.vmem [shape: f32[1,128], index: 2, kind: input, shape index: {}]
  %s3 = inlined_call_operand.hbm [shape: f32[4,128], index: 3, kind: output, shape index: {}]
  %s4 = sld [smem:[#allocation0]]
  $region30: #{tpu_custom_call.1} parent=0
    _
  %s6 = ssub.s32 1, %s4
  %s7 = scalar_select 0, %s6, %s4
  $region1: #{tpu_custom_call.1} parent=0
    #allocation2 [shape = 'u8[6144]{0}', space=vmem, size = 0x1800, scoped, tag = 'input window, operand 0, single buffered']
    #allocation3 [shape = 's32[1]{0}', space=sflag, size = 0x4, scoped, tag = 'scoped memory for tpu_custom_call.1']
    #allocation4 [shape = 's32[1]{0}', space=sflag, size = 0x4, scoped, tag = 'scoped memory for tpu_custom_call.1']
    #allocation5 [shape = 'u8[196608]{0}', space=vmem, size = 0x30000, scoped, tag = 'input window, operand 1, single buffered']
    #allocation6 [shape = 's32[1]{0}', space=sflag, size = 0x4, scoped, tag = 'scoped memory for tpu_custom_call.1']
    #allocation7 [shape = 'u8[2048]{0}', space=vmem, size = 0x800, scoped, tag = 'output window, operand 0, single buffered']
    %8 = vsyncpa [#allocation3], 0
    %9 = vsyncpa [#allocation6], 0
    %10 = vsyncpa [#allocation4], 0
    // Predicated region
    $region2: #{tpu_custom_call.1} parent=1 // pred_check
      _
    $region3: #{tpu_custom_call.1} parent=1 // pred_check_branch
      %12 = sbr.rel (0) target = $region5
    $region4: #{tpu_custom_call.1} parent=1 // pred_region
      %s14 = ssub.s32 192, 192
      %15 = vsyncadd [#allocation3], %s14
      %s17 = sshll.u32 [#allocation2], 4
      %s18 = int_to_ptr.vmem [resolvable:$true] %s17
      %20 = dma.hbm_to_vmem [thread:$0]  %s0, 192, %s18, [#allocation3]
    $region5: #{tpu_custom_call.1} parent=1 // pred_fallthru
      _
    // Predicated region
    $region6: #{tpu_custom_call.1} parent=1 // pred_check
      _
    $region7: #{tpu_custom_call.1} parent=1 // pred_check_branch
      %22 = sbr.rel (0) target = $region9
    $region8: #{tpu_custom_call.1} parent=1 // pred_region
      %s24 = ssub.s32 6144, 6144
      %25 = vsyncadd [#allocation6], %s24
      %s26 = sshll.u32 [#allocation5], 4
      %s27 = int_to_ptr.vmem [resolvable:$true] %s26
      %32 = dma.hbm_to_vmem [thread:$0]  %s1, 6144, %s27, [#allocation6], 128, 128, 8
    $region9: #{tpu_custom_call.1} parent=1 // pred_fallthru
      _
    // Predicated region
    $region10: #{tpu_custom_call.1} parent=1 // pred_check
      _
    $region11: #{tpu_custom_call.1} parent=1 // pred_check_branch
      %34 = sbr.rel (0) target = $region13
    $region12: #{tpu_custom_call.1} parent=1 // pred_region
      _
    $region13: #{tpu_custom_call.1} parent=1 // pred_fallthru
      _
    // Predicated region
    $region14: #{tpu_custom_call.1} parent=1 // pred_check
      _
    $region15: #{tpu_custom_call.1} parent=1 // pred_check_branch
      %36 = sbr.rel (0) target = $region17
    $region16: #{tpu_custom_call.1} parent=1 // pred_region
      %37 = dma.done [#allocation3], 192
    $region17: #{tpu_custom_call.1} parent=1 // pred_fallthru
      _
    // Predicated region
    $region18: #{tpu_custom_call.1} parent=1 // pred_check
      _
    $region19: #{tpu_custom_call.1} parent=1 // pred_check_branch
      %39 = sbr.rel (0) target = $region21
    $region20: #{tpu_custom_call.1} parent=1 // pred_region
      %40 = dma.done [#allocation6], 6144
    $region21: #{tpu_custom_call.1} parent=1 // pred_fallthru
      _
    %v41 = vld [vmem:[#allocation2] sm:$0xff]
    %v42 = vld [vmem:[#allocation2 + $0x8] sm:$0xf]
    %vm43 = vweird.f32 %v41
    %vm44 = vweird.f32 %v42
    %vm45 = vmxor %vm43, 1
    %vm46 = vmxor %vm44, 1
    %v47 = vsel %vm45, %v41, 0.0
    %v48 = vsel %vm46, %v42, 0.0
    %v49 = vld [vmem:[#allocation5] sm:$0xff]
    %v50 = vld [vmem:[#allocation5 + $0x8] sm:$0xff]
    %v51 = vld [vmem:[#allocation5 + $0x10] sm:$0xff]
    %v52 = vld [vmem:[#allocation5 + $0x18] sm:$0xff]
    %v53 = vld [vmem:[#allocation5 + $0x20] sm:$0xff]
    %v54 = vld [vmem:[#allocation5 + $0x28] sm:$0xff]
    %v55 = vld [vmem:[#allocation5 + $0x30] sm:$0xff]
    %v56 = vld [vmem:[#allocation5 + $0x38] sm:$0xff]
    %v57 = vld [vmem:[#allocation5 + $0x40] sm:$0xff]
    %v58 = vld [vmem:[#allocation5 + $0x48] sm:$0xff]
    %v59 = vld [vmem:[#allocation5 + $0x50] sm:$0xff]
    %v60 = vld [vmem:[#allocation5 + $0x58] sm:$0xff]
    %v61 = vld [vmem:[#allocation5 + $0x60] sm:$0xff]
    %v62 = vld [vmem:[#allocation5 + $0x68] sm:$0xff]
    %v63 = vld [vmem:[#allocation5 + $0x70] sm:$0xff]
    %v64 = vld [vmem:[#allocation5 + $0x78] sm:$0xff]
    %v65 = vld [vmem:[#allocation5 + $0x80] sm:$0xff]
    %v66 = vld [vmem:[#allocation5 + $0x88] sm:$0xff]
    %v67 = vld [vmem:[#allocation5 + $0x90] sm:$0xff]
    %v68 = vld [vmem:[#allocation5 + $0x98] sm:$0xff]
    %v69 = vld [vmem:[#allocation5 + $0xa0] sm:$0xff]
    %v70 = vld [vmem:[#allocation5 + $0xa8] sm:$0xff]
    %v71 = vld [vmem:[#allocation5 + $0xb0] sm:$0xff]
    %v72 = vld [vmem:[#allocation5 + $0xb8] sm:$0xff]
    %v73 = vld [vmem:[#allocation5 + $0xc0] sm:$0xff]
    %v74 = vld [vmem:[#allocation5 + $0xc8] sm:$0xff]
    %v75 = vld [vmem:[#allocation5 + $0xd0] sm:$0xff]
    %v76 = vld [vmem:[#allocation5 + $0xd8] sm:$0xff]
    %v77 = vld [vmem:[#allocation5 + $0xe0] sm:$0xff]
    %v78 = vld [vmem:[#allocation5 + $0xe8] sm:$0xff]
    %v79 = vld [vmem:[#allocation5 + $0xf0] sm:$0xff]
    %v80 = vld [vmem:[#allocation5 + $0xf8] sm:$0xff]
    %v81 = vld [vmem:[#allocation5 + $0x100] sm:$0xff]
    %v82 = vld [vmem:[#allocation5 + $0x108] sm:$0xff]
    %v83 = vld [vmem:[#allocation5 + $0x110] sm:$0xff]
    %v84 = vld [vmem:[#allocation5 + $0x118] sm:$0xff]
    %v85 = vld [vmem:[#allocation5 + $0x120] sm:$0xff]
    %v86 = vld [vmem:[#allocation5 + $0x128] sm:$0xff]
    %v87 = vld [vmem:[#allocation5 + $0x130] sm:$0xff]
    %v88 = vld [vmem:[#allocation5 + $0x138] sm:$0xff]
    %v89 = vld [vmem:[#allocation5 + $0x140] sm:$0xff]
    %v90 = vld [vmem:[#allocation5 + $0x148] sm:$0xff]
    %v91 = vld [vmem:[#allocation5 + $0x150] sm:$0xff]
    %v92 = vld [vmem:[#allocation5 + $0x158] sm:$0xff]
    %v93 = vld [vmem:[#allocation5 + $0x160] sm:$0xff]
    %v94 = vld [vmem:[#allocation5 + $0x168] sm:$0xff]
    %v95 = vld [vmem:[#allocation5 + $0x170] sm:$0xff]
    %v96 = vld [vmem:[#allocation5 + $0x178] sm:$0xff]
    %v97 = vld [vmem:[%s2] sm:$0x1]
    %v99 = vlaneseq
    %v100 = vshrl.u32 %v99, 7
    %v101 = vsub.s32 0, %v100
    %v102 = vrot.slane %v97, %v101
    %v105 = vcombine.high %v47, %v47
    %107 = vmatprep.subr.mxu0 0.0
    %108 = vmatpush1.msra.mxu0 %v49
    %109 = vmatprep.subr.mxu0 0.0
    %110 = vmatpush1.msra.mxu0 %v50
    %111 = vmatprep.subr.mxu0 0.0
    %112 = vmatpush1.msra.mxu0 %v51
    %113 = vmatprep.subr.mxu0 0.0
    %114 = vmatpush1.msra.mxu0 %v52
    %115 = vmatprep.subr.mxu0 0.0
    %116 = vmatpush1.msra.mxu0 %v53
    %117 = vmatprep.subr.mxu0 0.0
    %118 = vmatpush1.msra.mxu0 %v54
    %119 = vmatprep.subr.mxu0 0.0
    %120 = vmatpush1.msra.mxu0 %v55
    %121 = vmatprep.subr.mxu0 0.0
    %122 = vmatpush1.msra.mxu0 %v56
    %123 = vmatprep.subr.mxu0 0.0
    %124 = vmatpush1.msra.mxu0 %v57
    %125 = vmatprep.subr.mxu0 0.0
    %126 = vmatpush1.msra.mxu0 %v58
    %127 = vmatprep.subr.mxu0 0.0
    %128 = vmatpush1.msra.mxu0 %v59
    %129 = vmatprep.subr.mxu0 0.0
    %130 = vmatpush1.msra.mxu0 %v60
    %131 = vmatprep.subr.mxu0 0.0
    %132 = vmatpush1.msra.mxu0 %v61
    %133 = vmatprep.subr.mxu0 0.0
    %134 = vmatpush1.msra.mxu0 %v62
    %135 = vmatprep.subr.mxu0 0.0
    %136 = vmatpush1.msra.mxu0 %v63
    %137 = vmatprep.subr.mxu0 0.0
    %138 = vmatpush1.msra.mxu0 %v64
    %139 = vmatprep.subr.mxu0 0.0
    %140 = vmatpush1.msra.mxu0 %v65
    %141 = vmatprep.subr.mxu0 0.0
    %142 = vmatpush1.msra.mxu0 %v66
    %143 = vmatprep.subr.mxu0 0.0
    %144 = vmatpush1.msra.mxu0 %v67
    %145 = vmatprep.subr.mxu0 0.0
    %146 = vmatpush1.msra.mxu0 %v68
    %147 = vmatprep.subr.mxu0 0.0
    %148 = vmatpush1.msra.mxu0 %v69
    %149 = vmatprep.subr.mxu0 0.0
    %150 = vmatpush1.msra.mxu0 %v70
    %151 = vmatprep.subr.mxu0 0.0
    %152 = vmatpush1.msra.mxu0 %v71
    %153 = vmatprep.subr.mxu0 0.0
    %154 = vmatpush1.msra.mxu0 %v72
    %155 = vmatprep.subr.mxu0 0.0
    %156 = vmatpush1.msra.mxu0 %v73
    %157 = vmatprep.subr.mxu0 0.0
    %158 = vmatpush1.msra.mxu0 %v74
    %159 = vmatprep.subr.mxu0 0.0
    %160 = vmatpush1.msra.mxu0 %v75
    %161 = vmatprep.subr.mxu0 0.0
    %162 = vmatpush1.msra.mxu0 %v76
    %163 = vmatprep.subr.mxu0 0.0
    %164 = vmatpush1.msra.mxu0 %v77
    %165 = vmatprep.subr.mxu0 0.0
    %166 = vmatpush1.msra.mxu0 %v78
    %167 = vmatprep.subr.mxu0 0.0
    %168 = vmatpush1.msra.mxu0 %v79
    %169 = vmatprep.subr.mxu0 0.0
    %170 = vmatpush1.msra.mxu0 %v80
    %171 = vmatprep.mubr.f32.mxu0 %v105
    %172 = vmatmul.mubr.f32.gmra.mrb[0].mxu0 %v47
    %v173 = vpop.f32.mrb[0].mxu0
    %v174 = vadd.f32 %v102, %v173
    %v175 = vpop.f32.mrb[0].mxu0
    %176 = vdwg.mxu0
    %177 = vmatprep.subr.mxu0 0.0
    %178 = vmatpush1.msra.mxu0 %v81
    %179 = vmatprep.subr.mxu0 0.0
    %180 = vmatpush1.msra.mxu0 %v82
    %181 = vmatprep.subr.mxu0 0.0
    %182 = vmatpush1.msra.mxu0 %v83
    %183 = vmatprep.subr.mxu0 0.0
    %184 = vmatpush1.msra.mxu0 %v84
    %185 = vmatprep.subr.mxu0 0.0
    %186 = vmatpush1.msra.mxu0 %v85
    %187 = vmatprep.subr.mxu0 0.0
    %188 = vmatpush1.msra.mxu0 %v86
    %189 = vmatprep.subr.mxu0 0.0
    %190 = vmatpush1.msra.mxu0 %v87
    %191 = vmatprep.subr.mxu0 0.0
    %192 = vmatpush1.msra.mxu0 %v88
    %193 = vmatprep.subr.mxu0 0.0
    %194 = vmatpush1.msra.mxu0 %v89
    %195 = vmatprep.subr.mxu0 0.0
    %196 = vmatpush1.msra.mxu0 %v90
    %197 = vmatprep.subr.mxu0 0.0
    %198 = vmatpush1.msra.mxu0 %v91
    %199 = vmatprep.subr.mxu0 0.0
    %200 = vmatpush1.msra.mxu0 %v92
    %201 = vmatprep.subr.mxu0 0.0
    %202 = vmatpush1.msra.mxu0 %v93
    %203 = vmatprep.subr.mxu0 0.0
    %204 = vmatpush1.msra.mxu0 %v94
    %205 = vmatprep.subr.mxu0 0.0
    %206 = vmatpush1.msra.mxu0 %v95
    %207 = vmatprep.subr.mxu0 0.0
    %208 = vmatpush1.msra.mxu0 %v96
    %209 = vmatprep.subr.mxu0 0.0
    %210 = vmatpush1.msra.mxu0 0.0
    %211 = vmatprep.subr.mxu0 0.0
    %212 = vmatpush1.msra.mxu0 0.0
    %213 = vmatprep.subr.mxu0 0.0
    %214 = vmatpush1.msra.mxu0 0.0
    %215 = vmatprep.subr.mxu0 0.0
    %216 = vmatpush1.msra.mxu0 0.0
    %217 = vmatprep.subr.mxu0 0.0
    %218 = vmatpush1.msra.mxu0 0.0
    %219 = vmatprep.subr.mxu0 0.0
    %220 = vmatpush1.msra.mxu0 0.0
    %221 = vmatprep.subr.mxu0 0.0
    %222 = vmatpush1.msra.mxu0 0.0
    %223 = vmatprep.subr.mxu0 0.0
    %224 = vmatpush1.msra.mxu0 0.0
    %225 = vmatprep.subr.mxu0 0.0
    %226 = vmatpush1.msra.mxu0 0.0
    %227 = vmatprep.subr.mxu0 0.0
    %228 = vmatpush1.msra.mxu0 0.0
    %229 = vmatprep.subr.mxu0 0.0
    %230 = vmatpush1.msra.mxu0 0.0
    %231 = vmatprep.subr.mxu0 0.0
    %232 = vmatpush1.msra.mxu0 0.0
    %233 = vmatprep.subr.mxu0 0.0
    %234 = vmatpush1.msra.mxu0 0.0
    %235 = vmatprep.subr.mxu0 0.0
    %236 = vmatpush1.msra.mxu0 0.0
    %237 = vmatprep.subr.mxu0 0.0
    %238 = vmatpush1.msra.mxu0 0.0
    %239 = vmatprep.subr.mxu0 0.0
    %240 = vmatpush1.msra.mxu0 0.0
    %241 = vmatprep.mubr.f32.mxu0 0.0
    %242 = vmatmul.mubr.f32.gmra.mrb[0].mxu0 %v48
    %v243 = vpop.f32.mrb[0].mxu0
    %v244 = vadd.f32 %v174, %v243
    %v245 = vpop.f32.mrb[0].mxu0
    %246 = vdwg.mxu0
    %vm247 = vweird.f32 %v244
    %vm248 = vmxor %vm247, 1
    %v249 = vsel %vm248, %v244, 0.0
    %250 = vst [vmem:[#allocation7] sm:$0xf] %v249
    // Predicated region
    $region22: #{tpu_custom_call.1} parent=1 // pred_check
      _
    $region23: #{tpu_custom_call.1} parent=1 // pred_check_branch
      %252 = sbr.rel (0) target = $region25
    $region24: #{tpu_custom_call.1} parent=1 // pred_region
      %s254 = ssub.s32 64, 64
      %255 = vsyncadd [#allocation4], %s254
      %s257 = sshll.u32 [#allocation7], 4
      %s258 = int_to_ptr.vmem [resolvable:$true] %s257
      %260 = dma.vmem_to_hbm [thread:$0]  %s258, 64, %s3, [#allocation4]
    $region25: #{tpu_custom_call.1} parent=1 // pred_fallthru
      _
    // Predicated region
    $region26: #{tpu_custom_call.1} parent=1 // pred_check
      _
    $region27: #{tpu_custom_call.1} parent=1 // pred_check_branch
      %262 = sbr.rel (0) target = $region29
    $region28: #{tpu_custom_call.1} parent=1 // pred_region
      %263 = dma.done [#allocation4], 64
    $region29: #{tpu_custom_call.1} parent=1 // pred_fallthru
      _
    %264 = vsyncpa [#allocation3], 1
    %265 = vsyncpa [#allocation6], 1
    %266 = vsyncpa [#allocation4], 1

</llo_original>
